<compile_context>
chip_gen: v7x
topology: tpu7x:2x2x1
jax: 0.10.0
libtpu: 0.0.40
codegen_flags: <defaults>
</compile_context>

<pallas_src>
import functools

import jax
import jax.numpy as jnp
from jax import lax
from jax.experimental import pallas as pl
from jax.experimental.pallas import tpu as pltpu


_NEG_BIG = -1e30  # finite "minus infinity": exp underflows to 0, no NaN/Inf math


# ----------------------------------------------------------------------------
# Kernel: grid = (row tiles, class tiles).  Streams class tiles with an online
# logsumexp + fused weighted sum; writes per-row losses on the last class step.
# ----------------------------------------------------------------------------
def _ls_ce_kernel(
    x_ref,      # (bm, bc) logits tile (caller dtype; upcast in-kernel)
    t_ref,      # (bm, 1)  i32 target class for each row of this tile
    out_ref,    # (bm, 1)  f32 per-row loss (written on last class step)
    m_ref,      # (bm, 1)  f32 running row max          (VMEM scratch)
    s_ref,      # (bm, 1)  f32 running sum(exp(x - m))  (VMEM scratch)
    w_ref,      # (bm, 1)  f32 running weighted sum     (VMEM scratch)
    *,
    confidence: float,
    smooth_per_class: float,
    n_rows: int,
    n_cols: int,
    block_rows: int,
    block_cols: int,
):
    i = pl.program_id(0)      # row tile   ("parallel")
    c = pl.program_id(1)      # class tile ("arbitrary", innermost)

    @pl.when(c == 0)
    def _init():
        m_ref[...] = jnp.full_like(m_ref, _NEG_BIG)
        s_ref[...] = jnp.zeros_like(s_ref)
        w_ref[...] = jnp.zeros_like(w_ref)

    x = x_ref[...].astype(jnp.float32)        # (bm, bc) f32
    t = t_ref[...]                            # (bm, 1)  i32

    row_ids = i * block_rows + lax.broadcasted_iota(jnp.int32, x.shape, 0)
    col_ids = c * block_cols + lax.broadcasted_iota(jnp.int32, x.shape, 1)
    valid = jnp.logical_and(row_ids < n_rows, col_ids < n_cols)

    # --- online logsumexp over the class axis (padding masked to a finite
    #     very-negative value so exp underflows to 0 and max is unaffected) ---
    x_lse = jnp.where(valid, x, _NEG_BIG)
    m_prev = m_ref[...]
    m_new = jnp.maximum(m_prev, jnp.max(x_lse, axis=-1, keepdims=True))
    s_ref[...] = (s_ref[...] * jnp.exp(m_prev - m_new)
                  + jnp.sum(jnp.exp(x_lse - m_new), axis=-1, keepdims=True))
    m_ref[...] = m_new

    # --- fused gather + uniform-smoothing term: one weighted lane-reduce ---
    w = jnp.where(col_ids == t, confidence + smooth_per_class, smooth_per_class)
    w = jnp.where(valid, w, 0.0)
    x_safe = jnp.where(valid, x, 0.0)
    w_ref[...] += jnp.sum(w * x_safe, axis=-1, keepdims=True)

    @pl.when(c == pl.num_programs(1) - 1)
    def _finalize():
        loss = m_ref[...] + jnp.log(s_ref[...]) - w_ref[...]     # (bm, 1)
        rows = i * block_rows + lax.broadcasted_iota(jnp.int32, loss.shape, 0)
        out_ref[...] = jnp.where(rows < n_rows, loss, 0.0)


# ----------------------------------------------------------------------------
# Tile selection: budget-driven (default ~4 MiB per logits buffer).
# ----------------------------------------------------------------------------
def _pick_tiles(n_rows, n_cols, itemsize, block_rows, block_cols, target_bytes):
    # sublane multiple for the row dim (f32: 8, bf16/f16: 16, int8/fp8: 32)
    sub = 8 if itemsize >= 4 else (16 if itemsize == 2 else 32)
    n_pad = max(sub, pl.cdiv(n_rows, sub) * sub)

    # Class tile: keep the full class axis whenever a >= `sub`-row slab fits
    # the budget; otherwise stream it in multiples of 128 lanes.
    if block_cols is not None:
        bc = min(int(block_cols), n_cols)
        if bc < n_cols:
            bc = max(128, (bc // 128) * 128)
    elif n_cols * itemsize * sub <= target_bytes:
        bc = n_cols
    else:
        bc = None  # decided after bm (vocab-scale C)

    # Row tile: as many rows as the budget allows, clamped to [sub, 2048].
    if block_rows is not None:
        bm = max(sub, (int(block_rows) // sub) * sub)
    elif bc == n_cols:
        bm = max(sub, min((target_bytes // (n_cols * itemsize) // sub) * sub, 2048))
    else:
        bm = max(sub, 128)
    bm = min(bm, n_pad)

    if bc is None:  # vocab-scale C: tile the class axis to fit the budget
        bc = max(128, ((target_bytes // (bm * itemsize)) // 128) * 128)
        if bc >= n_cols:
            bc = n_cols
    return bm, bc


# ----------------------------------------------------------------------------
# Wrapper.
# ----------------------------------------------------------------------------
def label_smoothing_cross_entropy(x, target, smoothing=0.1,
                                  block_rows=None, block_cols=None,
                                  target_tile_bytes=4 * 1024 * 1024):
    assert x.ndim == 2 and target.ndim == 1 and target.shape[0] == x.shape[0]
    n_rows, n_cols = x.shape
    itemsize = jnp.dtype(x.dtype).itemsize

    bm, bc = _pick_tiles(n_rows, n_cols, itemsize, block_rows, block_cols,
                         target_tile_bytes)
    n_row_tiles = pl.cdiv(n_rows, bm)
    n_col_tiles = pl.cdiv(n_cols, bc)
    rows_out = n_row_tiles * bm

    # Pad only the tiny target vector (the big logits array is never copied).
    t2d = target.astype(jnp.int32).reshape(n_rows, 1)
    if rows_out != n_rows:
        t2d = jnp.pad(t2d, ((0, rows_out - n_rows), (0, 0)))

    kernel = functools.partial(
        _ls_ce_kernel,
        confidence=float(1.0 - smoothing),
        smooth_per_class=float(smoothing) / float(n_cols),
        n_rows=n_rows, n_cols=n_cols,
        block_rows=bm, block_cols=bc,
    )

    # Explicit VMEM budget: double-buffered logits tile + small buffers + scratch.
    lane = lambda n: pl.cdiv(n, 128) * 128
    x_tile_bytes = bm * lane(bc) * itemsize
    small_bytes = bm * 128 * 4
    need = 2 * (x_tile_bytes + 2 * small_bytes) + 3 * small_bytes
    vmem_limit = int(min(max(2 * need, 32 << 20), 64 << 20))

    per_row = pl.pallas_call(
        kernel,
        out_shape=jax.ShapeDtypeStruct((rows_out, 1), jnp.float32),
        grid_spec=pltpu.PrefetchScalarGridSpec(
            num_scalar_prefetch=0,
            grid=(n_row_tiles, n_col_tiles),
            in_specs=[
                pl.BlockSpec((bm, bc), lambda i, c: (i, c)),   # logits tile
                pl.BlockSpec((bm, 1), lambda i, c: (i, 0)),    # targets tile
            ],
            out_specs=pl.BlockSpec((bm, 1), lambda i, c: (i, 0)),
            scratch_shapes=[pltpu.VMEM((bm, 1), jnp.float32)] * 3,
        ),
        compiler_params=pltpu.CompilerParams(
            dimension_semantics=("parallel", "arbitrary"),
            vmem_limit_bytes=vmem_limit,
        ),
    )(x, t2d)

    # Final mean: one trivial reduction over <= rows_out scalars.
    return jnp.sum(per_row) * (1.0 / float(n_rows))


# ----------------------------------------------------------------------------
# Pure-JAX reference (mirrors the PyTorch forward exactly).
# ----------------------------------------------------------------------------
def label_smoothing_cross_entropy_ref(x, target, smoothing=0.1):
    n_cls = x.shape[1]
    logp = jax.nn.log_softmax(x.astype(jnp.float32), axis=-1)
    onehot = jax.nn.one_hot(target, n_cls, dtype=jnp.float32)
    tgt = onehot * (1.0 - smoothing) + smoothing / n_cls
    return jnp.mean(jnp.sum(-tgt * logp, axis=1))


# ----------------------------------------------------------------------------
# Smoke tests.
# ----------------------------------------------------------------------------
if __name__ == "__main__":
    key = jax.random.PRNGKey(0)
    k1, k2, k3, k4 = jax.random.split(key, 4)
    smoothing = 0.1

    # Case 1: f32 logits, ragged row count, forced small tiles -> grid (3, 3):
    # exercises the row-tail mask, class-tail mask and streaming logsumexp.
    n1, c1 = 37, 288
    x1 = jax.random.normal(k1, (n1, c1), jnp.float32) * 3.0
    t1 = jax.random.randint(k2, (n1,), 0, c1, dtype=jnp.int32)
    out1 = label_smoothing_cross_entropy(x1, t1, smoothing=smoothing,
                                         block_rows=16, block_cols=128)
    out1 = jax.block_until_ready(out1)
    ref1 = label_smoothing_cross_entropy_ref(x1, t1, smoothing=smoothing)
    assert out1.shape == ()
    assert jnp.allclose(out1, ref1, rtol=1e-5, atol=1e-5), (out1, ref1)

    # Case 2: bf16 logits with the default budget-derived tiling — no wrapper
    # cast/pad; the kernel DMAs bf16 and upcasts in VMEM.
    n2, c2 = 64, 100
    x2 = (jax.random.normal(k3, (n2, c2), jnp.float32) * 2.0).astype(jnp.bfloat16)
    t2 = jax.random.randint(k4, (n2,), 0, c2, dtype=jnp.int32)
    out2 = label_smoothing_cross_entropy(x2, t2, smoothing=smoothing)
    out2 = jax.block_until_ready(out2)
    ref2 = label_smoothing_cross_entropy_ref(x2, t2, smoothing=smoothing)
    assert out2.shape == ()
    assert jnp.allclose(out2, ref2, rtol=1e-4, atol=1e-4), (out2, ref2)

    print("KERNEL_OK")
</pallas_src>

<mosaic_0001>
module attributes {stable_mosaic.version = 11 : i64} {
  func.func @_ls_ce_kernel(%arg0: i32, %arg1: i32, %arg2: memref<16x128xf32, #tpu.memory_space<vmem>>, %arg3: memref<16x1xi32, #tpu.memory_space<vmem>>, %arg4: memref<16x1xf32, #tpu.memory_space<vmem>>, %arg5: memref<16x1xf32, #tpu.memory_space<vmem>>, %arg6: memref<16x1xf32, #tpu.memory_space<vmem>>, %arg7: memref<16x1xf32, #tpu.memory_space<vmem>>) attributes {dimension_semantics = [#tpu.dimension_semantics<parallel>, #tpu.dimension_semantics<arbitrary>], iteration_bounds = array<i64: 3, 3>, scalar_prefetch = 0 : i64, scratch_operands = 3 : i64, tpu.core_type = #tpu.core_type<tc>, window_params = [{transform_indices = @transform_0, window_bounds = array<i64: 16, 128>}, {transform_indices = @transform_1, window_bounds = array<i64: 16, 1>}, {transform_indices = @transform_2, window_bounds = array<i64: 16, 1>}]} {
    %c0_i32 = arith.constant 0 : i32
    %0 = arith.cmpi eq, %arg1, %c0_i32 : i32
    %1 = arith.extui %0 : i1 to i32
    %c0_i32_0 = arith.constant 0 : i32
    %2 = arith.cmpi ne, %1, %c0_i32_0 : i32
    scf.if %2 {
      %cst_24 = arith.constant -1.000000e+30 : f32
      %54 = vector.broadcast %cst_24 : f32 to vector<16x1xf32>
      %c0_25 = arith.constant 0 : index
      %c0_26 = arith.constant 0 : index
      %55 = vector.load %arg5[%c0_25, %c0_26] : memref<16x1xf32, #tpu.memory_space<vmem>>, vector<16x1xf32>
      tpu.vector_store %arg5[%c0_25, %c0_26], %54 {strides = array<i32>} : memref<16x1xf32, #tpu.memory_space<vmem>>, vector<16x1xf32>,
      %cst_27 = arith.constant 0.000000e+00 : f32
      %56 = vector.broadcast %cst_27 : f32 to vector<16x1xf32>
      %c0_28 = arith.constant 0 : index
      %c0_29 = arith.constant 0 : index
      %57 = vector.load %arg6[%c0_28, %c0_29] : memref<16x1xf32, #tpu.memory_space<vmem>>, vector<16x1xf32>
      tpu.vector_store %arg6[%c0_28, %c0_29], %56 {strides = array<i32>} : memref<16x1xf32, #tpu.memory_space<vmem>>, vector<16x1xf32>,
      %cst_30 = arith.constant 0.000000e+00 : f32
      %58 = vector.broadcast %cst_30 : f32 to vector<16x1xf32>
      %c0_31 = arith.constant 0 : index
      %c0_32 = arith.constant 0 : index
      %59 = vector.load %arg7[%c0_31, %c0_32] : memref<16x1xf32, #tpu.memory_space<vmem>>, vector<16x1xf32>
      tpu.vector_store %arg7[%c0_31, %c0_32], %58 {strides = array<i32>} : memref<16x1xf32, #tpu.memory_space<vmem>>, vector<16x1xf32>,
    } else {
    }
    %c0 = arith.constant 0 : index
    %c0_1 = arith.constant 0 : index
    %3 = vector.load %arg2[%c0, %c0_1] : memref<16x128xf32, #tpu.memory_space<vmem>>, vector<16x128xf32>
    %c0_2 = arith.constant 0 : index
    %c0_3 = arith.constant 0 : index
    %4 = vector.load %arg3[%c0_2, %c0_3] : memref<16x1xi32, #tpu.memory_space<vmem>>, vector<16x1xi32>
    %c16_i32 = arith.constant 16 : i32
    %5 = arith.muli %arg0, %c16_i32 : i32
    %6 = tpu.iota {dimensions = array<i32: 0>} : vector<16x128xi32>
    %7 = vector.broadcast %5 : i32 to vector<16x128xi32>
    %8 = arith.addi %7, %6 : vector<16x128xi32>
    %c128_i32 = arith.constant 128 : i32
    %9 = arith.muli %arg1, %c128_i32 : i32
    %10 = tpu.iota {dimensions = array<i32: 1>} : vector<16x128xi32>
    %11 = vector.broadcast %9 : i32 to vector<16x128xi32>
    %12 = arith.addi %11, %10 : vector<16x128xi32>
    %c37_i32 = arith.constant 37 : i32
    %13 = vector.broadcast %c37_i32 : i32 to vector<16x128xi32>
    %14 = arith.cmpi slt, %8, %13 : vector<16x128xi32>
    %c288_i32 = arith.constant 288 : i32
    %15 = vector.broadcast %c288_i32 : i32 to vector<16x128xi32>
    %16 = arith.cmpi slt, %12, %15 : vector<16x128xi32>
    %17 = arith.andi %14, %16 : vector<16x128xi1>
    %cst = arith.constant -1.000000e+30 : f32
    %18 = vector.broadcast %cst : f32 to vector<16x128xf32>
    %19 = arith.select %17, %3, %18 : vector<16x128xi1>, vector<16x128xf32>
    %c0_4 = arith.constant 0 : index
    %c0_5 = arith.constant 0 : index
    %20 = vector.load %arg5[%c0_4, %c0_5] : memref<16x1xf32, #tpu.memory_space<vmem>>, vector<16x1xf32>
    %cst_6 = arith.constant dense<0xFF800000> : vector<16xf32>
    %21 = vector.multi_reduction <maximumf>, %19, %cst_6 [1] : vector<16x128xf32> to vector<16xf32>
    %22 = vector.shape_cast %21 : vector<16xf32> to vector<16x1xf32>
    %23 = arith.maximumf %20, %22 : vector<16x1xf32>
    %c0_7 = arith.constant 0 : index
    %c0_8 = arith.constant 0 : index
    %24 = vector.load %arg6[%c0_7, %c0_8] : memref<16x1xf32, #tpu.memory_space<vmem>>, vector<16x1xf32>
    %25 = arith.subf %20, %23 : vector<16x1xf32>
    %26 = math.exp %25 : vector<16x1xf32>
    %27 = arith.mulf %24, %26 : vector<16x1xf32>
    %28 = vector.broadcast %23 : vector<16x1xf32> to vector<16x128xf32>
    %29 = arith.subf %19, %28 : vector<16x128xf32>
    %30 = math.exp %29 : vector<16x128xf32>
    %cst_9 = arith.constant dense<0.000000e+00> : vector<16xf32>
    %31 = vector.multi_reduction <add>, %30, %cst_9 [1] : vector<16x128xf32> to vector<16xf32>
    %32 = vector.shape_cast %31 : vector<16xf32> to vector<16x1xf32>
    %33 = arith.addf %27, %32 : vector<16x1xf32>
    %c0_10 = arith.constant 0 : index
    %c0_11 = arith.constant 0 : index
    %34 = vector.load %arg6[%c0_10, %c0_11] : memref<16x1xf32, #tpu.memory_space<vmem>>, vector<16x1xf32>
    tpu.vector_store %arg6[%c0_10, %c0_11], %33 {strides = array<i32>} : memref<16x1xf32, #tpu.memory_space<vmem>>, vector<16x1xf32>,
    %c0_12 = arith.constant 0 : index
    %c0_13 = arith.constant 0 : index
    %35 = vector.load %arg5[%c0_12, %c0_13] : memref<16x1xf32, #tpu.memory_space<vmem>>, vector<16x1xf32>
    tpu.vector_store %arg5[%c0_12, %c0_13], %23 {strides = array<i32>} : memref<16x1xf32, #tpu.memory_space<vmem>>, vector<16x1xf32>,
    %36 = vector.broadcast %4 : vector<16x1xi32> to vector<16x128xi32>
    %37 = arith.cmpi eq, %12, %36 : vector<16x128xi32>
    %cst_14 = arith.constant 0.900347232 : f32
    %cst_15 = arith.constant 3.47222231E-4 : f32
    %38 = vector.broadcast %cst_14 : f32 to vector<16x128xf32>
    %39 = vector.broadcast %cst_15 : f32 to vector<16x128xf32>
    %40 = arith.select %37, %38, %39 : vector<16x128xi1>, vector<16x128xf32>
    %cst_16 = arith.constant 0.000000e+00 : f32
    %41 = vector.broadcast %cst_16 : f32 to vector<16x128xf32>
    %42 = arith.select %17, %40, %41 : vector<16x128xi1>, vector<16x128xf32>
    %cst_17 = arith.constant 0.000000e+00 : f32
    %43 = vector.broadcast %cst_17 : f32 to vector<16x128xf32>
    %44 = arith.select %17, %3, %43 : vector<16x128xi1>, vector<16x128xf32>
    %c0_18 = arith.constant 0 : index
    %c0_19 = arith.constant 0 : index
    %45 = vector.load %arg7[%c0_18, %c0_19] : memref<16x1xf32, #tpu.memory_space<vmem>>, vector<16x1xf32>
    %46 = arith.mulf %42, %44 : vector<16x128xf32>
    %cst_20 = arith.constant dense<0.000000e+00> : vector<16xf32>
    %47 = vector.multi_reduction <add>, %46, %cst_20 [1] : vector<16x128xf32> to vector<16xf32>
    %48 = vector.shape_cast %47 : vector<16xf32> to vector<16x1xf32>
    %49 = arith.addf %45, %48 : vector<16x1xf32>
    %c0_21 = arith.constant 0 : index
    %c0_22 = arith.constant 0 : index
    %50 = vector.load %arg7[%c0_21, %c0_22] : memref<16x1xf32, #tpu.memory_space<vmem>>, vector<16x1xf32>
    tpu.vector_store %arg7[%c0_21, %c0_22], %49 {strides = array<i32>} : memref<16x1xf32, #tpu.memory_space<vmem>>, vector<16x1xf32>,
    %c2_i32 = arith.constant 2 : i32
    %51 = arith.cmpi eq, %arg1, %c2_i32 : i32
    %52 = arith.extui %51 : i1 to i32
    %c0_i32_23 = arith.constant 0 : i32
    %53 = arith.cmpi ne, %52, %c0_i32_23 : i32
    scf.if %53 {
      %c0_24 = arith.constant 0 : index
      %c0_25 = arith.constant 0 : index
      %54 = vector.load %arg5[%c0_24, %c0_25] : memref<16x1xf32, #tpu.memory_space<vmem>>, vector<16x1xf32>
      %c0_26 = arith.constant 0 : index
      %c0_27 = arith.constant 0 : index
      %55 = vector.load %arg6[%c0_26, %c0_27] : memref<16x1xf32, #tpu.memory_space<vmem>>, vector<16x1xf32>
      %56 = math.log %55 : vector<16x1xf32>
      %57 = arith.addf %54, %56 : vector<16x1xf32>
      %c0_28 = arith.constant 0 : index
      %c0_29 = arith.constant 0 : index
      %58 = vector.load %arg7[%c0_28, %c0_29] : memref<16x1xf32, #tpu.memory_space<vmem>>, vector<16x1xf32>
      %59 = arith.subf %57, %58 : vector<16x1xf32>
      %c16_i32_30 = arith.constant 16 : i32
      %60 = arith.muli %arg0, %c16_i32_30 : i32
      %61 = tpu.iota {dimensions = array<i32: 0>} : vector<16x1xi32>
      %62 = vector.broadcast %60 : i32 to vector<16x1xi32>
      %63 = arith.addi %62, %61 : vector<16x1xi32>
      %c37_i32_31 = arith.constant 37 : i32
      %64 = vector.broadcast %c37_i32_31 : i32 to vector<16x1xi32>
      %65 = arith.cmpi slt, %63, %64 : vector<16x1xi32>
      %cst_32 = arith.constant 0.000000e+00 : f32
      %66 = vector.broadcast %cst_32 : f32 to vector<16x1xf32>
      %67 = arith.select %65, %59, %66 : vector<16x1xi1>, vector<16x1xf32>
      %c0_33 = arith.constant 0 : index
      %c0_34 = arith.constant 0 : index
      %68 = vector.load %arg4[%c0_33, %c0_34] : memref<16x1xf32, #tpu.memory_space<vmem>>, vector<16x1xf32>
      tpu.vector_store %arg4[%c0_33, %c0_34], %67 {strides = array<i32>} : memref<16x1xf32, #tpu.memory_space<vmem>>, vector<16x1xf32>,
    } else {
    }
    return
  }
  func.func @transform_0(%arg0: i32, %arg1: i32) -> (i32, i32) {
    %c0_i32 = arith.constant 0 : i32
    return %arg0, %arg1 : i32, i32
  }
  func.func @transform_1(%arg0: i32, %arg1: i32) -> (i32, i32) {
    %c0_i32 = arith.constant 0 : i32
    %c0_i32_0 = arith.constant 0 : i32
    return %arg0, %c0_i32 : i32, i32
  }
  func.func @transform_2(%arg0: i32, %arg1: i32) -> (i32, i32) {
    %c0_i32 = arith.constant 0 : i32
    %c0_i32_0 = arith.constant 0 : i32
    return %arg0, %c0_i32 : i32, i32
  }
}

</mosaic_0001>

<llo_original>
// kernel: tpu_custom_call.1
$region0: #{tpu_custom_call.1}
  #allocation0 [shape = 'u32[]', space=smem, size = 0x4, offset = 0x4, fixed_abs, tag = 'smem constant byte address 0x4 - core index']
  #allocation1 [shape = 'u32[144,128]{1,0:T(1,128)}', space=vmem, size = 0x12000, scoped, tag = 'internal scratch']
  #allocation2 [shape = 'f32[16,1]{1,0:T(8,128)}', space=vmem, size = 0x2000, scoped, tag = 'scratch operand']
  #allocation3 [shape = 'f32[16,1]{1,0:T(8,128)}', space=vmem, size = 0x2000, scoped, tag = 'scratch operand']
  #allocation4 [shape = 'f32[16,1]{1,0:T(8,128)}', space=vmem, size = 0x2000, scoped, tag = 'scratch operand']
  %s0 = inlined_call_operand.hbm [shape: f32[37,288], index: 0, kind: input, shape index: {}]
  %s1 = inlined_call_operand.vmem [shape: s32[48,1], index: 1, kind: input, shape index: {}]
  %s2 = inlined_call_operand.vmem [shape: f32[48,1], index: 2, kind: output, shape index: {}]
  %s3 = sld [smem:[#allocation0]]
  $region53: #{tpu_custom_call.1} parent=0
    _
  %s5 = ssub.s32 1, %s3
  %s6 = scalar_select 0, %s5, %s3
  $region1: #{tpu_custom_call.1} parent=0
    #allocation5 [shape = 'u8[16384]{0}', space=vmem, size = 0x4000, scoped, tag = 'input window, operand 0']
    #allocation6 [shape = 's32[2]{0}', space=sflag, size = 0x8, scoped, tag = 'scoped memory for tpu_custom_call.1']
    %7 = vsyncpa [#allocation6], 0
    %s8 = scalar_lea.sflag [#allocation6], 1
    %9 = vsyncpa %s8, 0
    loop: start=0, step=1, limit=11
    $region2: #{tpu_custom_call.1} parent=1 // loop_pre_header
      _
    $region3: #{tpu_custom_call.1} parent=1 // loop_header
      %s11 = sphi 0, %s15
      %p12 = scmp.ge.s32.totalorder %s11, 11
      %s18 = sphi 0, %s30
      %s19 = sphi 0, %s26
      %s20 = sphi 0, %s18
      %s21 = sphi 0, %s19
      %s22 = sphi 0, %s20
      %s23 = sphi 0, %s21
      %s35 = sphi 0, %s37
      %s38 = sphi 0, %s35
      %s39 = sphi 0, %s38
      %s55 = sphi 0, %s39
      %s61 = sphi 0, %s63
      %s64 = sphi 0, %s61
      %s65 = sphi 0, %s64
      %s81 = sphi 0, %s65
      %s87 = sphi 0, %s89
      %s90 = sphi 0, %s87
      %s91 = sphi 0, %s90
      %s107 = sphi 0, %s91
    $region4: #{tpu_custom_call.1} parent=1 // loop_header_branch
      %14 = sbr.rel (%p12) target = $region8
    $region5: #{tpu_custom_call.1} parent=1 // loop_body
      %s16 = ssub.s32 %s11, 1
      %s17 = ssub.s32 %s11, 2
      %s24 = sadd.s32 1, %s19
      %p25 = scmp.ge.s32.totalorder %s24, 3
      %s26 = scalar_select %p25, 0, %s24
      %s27 = sadd.s32 1, %s18
      %s28 = scalar_select %p25, %s27, %s18
      %p29 = scmp.ge.s32.totalorder %s28, 3
      %s30 = scalar_select %p29, 0, %s28
      %s31 = ssub.s32 %s18, %s30
      %s32 = ssub.s32 %s19, %s26
      %s33 = sor.u32 %s31, %s32
      %p34 = scmp.eq.s32.totalorder %s33, 0
      %s36 = sadd.s32 %s35, 1
      %s37 = scalar_select %p34, %s35, %s36
      %p40 = pneg %p34
      %p41 = scmp.eq.s32.totalorder %s11, 8
      %p42 = por %p40, %p41
      %p43 = scmp.ne.s32.totalorder %s35, %s38
      %p44 = scmp.eq.s32.totalorder %s11, 0
      %p45 = por %p43, %p44
      %p46 = scmp.ne.s32.totalorder %s35, %s38
      %p47 = scmp.eq.s32.totalorder %s16, 8
      %p48 = por %p46, %p47
      %p49 = scmp.ne.s32.totalorder %s38, %s39
      %p50 = scmp.eq.s32.totalorder %s16, 0
      %p51 = por %p49, %p50
      %p52 = scmp.ne.s32.totalorder %s38, %s39
      %p53 = scmp.eq.s32.totalorder %s17, 8
      %p54 = por %p52, %p53
      %p56 = scmp.ne.s32.totalorder %s39, %s55
      %p57 = scmp.eq.s32.totalorder %s17, 0
      %p58 = por %p56, %p57
      %s59 = ssub.s32 %s18, %s30
      %p60 = scmp.eq.s32.totalorder %s59, 0
      %s62 = sadd.s32 %s61, 1
      %s63 = scalar_select %p60, %s61, %s62
      %p66 = pneg %p60
      %p67 = scmp.eq.s32.totalorder %s11, 8
      %p68 = por %p66, %p67
      %p69 = scmp.ne.s32.totalorder %s61, %s64
      %p70 = scmp.eq.s32.totalorder %s11, 0
      %p71 = por %p69, %p70
      %p72 = scmp.ne.s32.totalorder %s61, %s64
      %p73 = scmp.eq.s32.totalorder %s16, 8
      %p74 = por %p72, %p73
      %p75 = scmp.ne.s32.totalorder %s64, %s65
      %p76 = scmp.eq.s32.totalorder %s16, 0
      %p77 = por %p75, %p76
      %p78 = scmp.ne.s32.totalorder %s64, %s65
      %p79 = scmp.eq.s32.totalorder %s17, 8
      %p80 = por %p78, %p79
      %p82 = scmp.ne.s32.totalorder %s65, %s81
      %p83 = scmp.eq.s32.totalorder %s17, 0
      %p84 = por %p82, %p83
      %s85 = ssub.s32 %s18, %s30
      %p86 = scmp.eq.s32.totalorder %s85, 0
      %s88 = sadd.s32 %s87, 1
      %s89 = scalar_select %p86, %s87, %s88
      %p92 = pneg %p86
      %p93 = scmp.eq.s32.totalorder %s11, 8
      %p94 = por %p92, %p93
      %p95 = scmp.ne.s32.totalorder %s87, %s90
      %p96 = scmp.eq.s32.totalorder %s11, 0
      %p97 = por %p95, %p96
      %p98 = scmp.ne.s32.totalorder %s87, %s90
      %p99 = scmp.eq.s32.totalorder %s16, 8
      %p100 = por %p98, %p99
      %p101 = scmp.ne.s32.totalorder %s90, %s91
      %p102 = scmp.eq.s32.totalorder %s16, 0
      %p103 = por %p101, %p102
      %p104 = scmp.ne.s32.totalorder %s90, %s91
      %p105 = scmp.eq.s32.totalorder %s17, 8
      %p106 = por %p104, %p105
      %p108 = scmp.ne.s32.totalorder %s91, %s107
      %p109 = scmp.eq.s32.totalorder %s17, 0
      %p110 = por %p108, %p109
      %p111 = scmp.le.s32.totalorder 1, %s11
      %p112 = scmp.lt.s32.totalorder %s11, 10
      %p113 = pnand %p111, %p112
      %p114 = pneg %p113
      // Predicated region
      $region9: #{tpu_custom_call.1} parent=5 // pred_check
        _
      $region10: #{tpu_custom_call.1} parent=5 // pred_check_branch
        %116 = sbr.rel (%p113) target = $region12
      $region11: #{tpu_custom_call.1} parent=5 // pred_region
        %s117 = ssub.s32 %s11, 1
      $region12: #{tpu_custom_call.1} parent=5 // pred_fallthru
        _
      %p118 = scmp.lt.s32.totalorder %s11, 9
      // Predicated region
      $region13: #{tpu_custom_call.1} parent=5 // pred_check
        %p119 = pneg %p118
      $region14: #{tpu_custom_call.1} parent=5 // pred_check_branch
        %121 = sbr.rel (%p119) target = $region16
      $region15: #{tpu_custom_call.1} parent=5 // pred_region
        // Predicated region
        $region17: #{tpu_custom_call.1} parent=15 // pred_check
          %p122 = pneg %p45
        $region18: #{tpu_custom_call.1} parent=15 // pred_check_branch
          %124 = sbr.rel (%p122) target = $region20
        $region19: #{tpu_custom_call.1} parent=15 // pred_region
          %s125 = sand.u32 %s35, 1
          %s126 = scalar_lea.sflag [#allocation6], %s125
          %s127 = sand.u32 %s35, 1
          %s128 = smul.addr %s127, 16
          %s129 = scalar_lea.vmem [#allocation5], %s128
          %s130 = smul.u32 2, %s18
          %s131 = ssub.s32 5, %s130
          %p132 = scmp.lt.s32.totalorder %s131, 2
          %s133 = scalar_select %p132, %s131, 2
          %s134 = smul.u32 128, %s133
          %s136 = ssub.s32 256, %s134
          %137 = vsyncadd %s126, %s136
          %p138 = scmp.ne.s32.totalorder 0, %s134
          %s139 = smul.addr %s130, 3
          %s140 = sadd.s32 %s19, %s139
          %s141 = smul.addr %s140, 128
          %s142 = scalar_lea.hbm %s0, %s141
          %s143 = smul.u32 8, %s133
          %s144 = sshll.u32 %s129, 4
          %s145 = int_to_ptr.vmem [resolvable:$true] %s144
          %s146 = sshll.u32 %s143, 4
          %150 = dma.hbm_to_vmem [thread:$0]  (%p138), %s142, %s146, %s145, %s126, 384, 128, 8
        $region20: #{tpu_custom_call.1} parent=15 // pred_fallthru
          _
        // Predicated region
        $region21: #{tpu_custom_call.1} parent=15 // pred_check
          %p151 = pneg %p71
        $region22: #{tpu_custom_call.1} parent=15 // pred_check_branch
          %153 = sbr.rel (%p151) target = $region24
        $region23: #{tpu_custom_call.1} parent=15 // pred_region
          %s154 = smul.u32 2, %s18
          %p155 = scmp.lt.s32.totalorder %s154, 5
          %s156 = scalar_select %p155, %s154, 5
          %s157 = smul.addr %s156, 8
          %s158 = scalar_lea.vmem %s1, %s157
          %s159 = smul.u32 2, %s18
        $region24: #{tpu_custom_call.1} parent=15 // pred_fallthru
          _
      $region16: #{tpu_custom_call.1} parent=5 // pred_fallthru
        _
      %p160 = scmp.le.s32.totalorder 1, %s11
      %p161 = scmp.lt.s32.totalorder %s11, 10
      %p162 = pnand %p160, %p161
      %p163 = pneg %p162
      // Predicated region
      $region25: #{tpu_custom_call.1} parent=5 // pred_check
        _
      $region26: #{tpu_custom_call.1} parent=5 // pred_check_branch
        %165 = sbr.rel (%p162) target = $region28
      $region27: #{tpu_custom_call.1} parent=5 // pred_region
        %s166 = ssub.s32 %s11, 1
        %s167 = sand.u32 %s38, 1
        %s168 = scalar_lea.sflag [#allocation6], %s167
        %s169 = sand.u32 %s38, 1
        %s170 = smul.addr %s169, 16
        %s171 = scalar_lea.vmem [#allocation5], %s170
        // Predicated region
        $region29: #{tpu_custom_call.1} parent=27 // pred_check
          %p172 = pneg %p51
        $region30: #{tpu_custom_call.1} parent=27 // pred_check_branch
          %174 = sbr.rel (%p172) target = $region32
        $region31: #{tpu_custom_call.1} parent=27 // pred_region
          %175 = dma.done %s168, 256
        $region32: #{tpu_custom_call.1} parent=27 // pred_fallthru
          _
        %s176 = sand.u32 %s38, 1
        %s177 = scalar_lea.sflag [#allocation6], %s176
        %s178 = sand.u32 %s38, 1
        %s179 = smul.addr %s178, 16
        %s180 = scalar_lea.vmem [#allocation5], %s179
        %p181 = pneg %p51
        %p182 = pneg %p48
        %s183 = smul.u32 2, %s20
        %p184 = scmp.lt.s32.totalorder %s183, 5
        %s185 = scalar_select %p184, %s183, 5
        %s186 = smul.addr %s185, 8
        %s187 = scalar_lea.vmem %s1, %s186
        %p188 = pneg %p77
        %p189 = pneg %p74
        %p190 = pneg %p103
        %p191 = pneg %p100
        %s192 = smul.u32 2, %s20
        %p193 = scmp.lt.s32.totalorder %s192, 5
        %s194 = scalar_select %p193, %s192, 5
        %s195 = smul.addr %s194, 8
        %s196 = scalar_lea.vmem %s2, %s195
        %s197 = smul.u32 2, %s20
        %s198 = ssub.s32 5, %s197
        %p199 = scmp.lt.s32.totalorder %s198, 2
        %s200 = scalar_select %p199, %s198, 2
        %s201 = smul.u32 128, %s200
        %s202 = smul.u32 2, %s20
        %p203 = scmp.lt.s32.totalorder %s202, 5
        %s204 = scalar_select %p203, %s202, 5
        %s205 = smul.addr %s204, 8
        %s206 = scalar_lea.vmem %s1, %s205
        %s207 = smul.u32 2, %s20
        %s208 = smul.u32 2, %s20
        %p209 = scmp.lt.s32.totalorder %s208, 5
        %s210 = scalar_select %p209, %s208, 5
        %s211 = smul.addr %s210, 8
        %s212 = scalar_lea.vmem %s2, %s211
        %s213 = smul.u32 2, %s20
        %p214 = scmp.eq.s32.totalorder %s21, 0
        // Predicated region
        $region33: #{tpu_custom_call.1} parent=27 // pred_check
          %p215 = pneg %p214
        $region34: #{tpu_custom_call.1} parent=27 // pred_check_branch
          %217 = sbr.rel (%p215) target = $region36
        $region35: #{tpu_custom_call.1} parent=27 // pred_region
          %vm218 = vcmask 7168
          %219 = vst.msk [vmem:[#allocation2] sm:$0xff] %vm218, -1e+30
          %220 = vst.msk [vmem:[#allocation2 + $0x8] sm:$0xff] %vm218, -1e+30
          %221 = vst.msk [vmem:[#allocation3] sm:$0xff] %vm218, 0.0
          %222 = vst.msk [vmem:[#allocation3 + $0x8] sm:$0xff] %vm218, 0.0
          %223 = vst.msk [vmem:[#allocation4] sm:$0xff] %vm218, 0.0
          %224 = vst.msk [vmem:[#allocation4 + $0x8] sm:$0xff] %vm218, 0.0
        $region36: #{tpu_custom_call.1} parent=27 // pred_fallthru
          _
        %v225 = vld [vmem:[%s171] sm:$0xff]
        %v226 = vld [vmem:[%s171 + $0x8] sm:$0xff]
        %v227 = vld [vmem:[%s206] sm:$0xff]
        %v228 = vld [vmem:[%s206 + $0x8] sm:$0xff]
        %s229 = smul.u32 %s20, 16
        %v230 = vlaneseq
        %v231 = vshrl.u32 %v230, 7
        %v232 = vadd.s32 %v231, 8
        %v233 = vstv %s229
        %v234 = vadd.s32 %v233, %v231
        %v235 = vadd.s32 %v233, %v232
        %s236 = smul.u32 %s21, 128
        %v237 = vlaneseq
        %v238 = vand.u32 %v237, 127
        %v239 = vstv %s236
        %v240 = vadd.s32 %v239, %v238
        %vm241 = vcmp.lt.s32.totalorder %v234, 37
        %vm242 = vcmp.lt.s32.totalorder %v235, 37
        %vm243 = vcmp.lt.s32.totalorder %v240, 288
        %vm244 = vmand %vm241, %vm243
        %vm245 = vmand %vm242, %vm243
        %v246 = vsel %vm244, %v225, -1e+30
        %v247 = vsel %vm245, %v226, -1e+30
        %v248 = vld [vmem:[#allocation2] sm:$0xff]
        %v249 = vld [vmem:[#allocation2 + $0x8] sm:$0xff]
        %250 = vmax.xlane.f32.xlu0 %v246
        %v251 = vpop.xlane.xlu0 %250
        %252 = vmax.xlane.f32.xlu0 %v247
        %v253 = vpop.xlane.xlu0 %252
        %v254 = vmax.f32 %v248, %v251
        %v255 = vmax.f32 %v249, %v253
        %v256 = vld [vmem:[#allocation3] sm:$0xff]
        %v257 = vld [vmem:[#allocation3 + $0x8] sm:$0xff]
        %v258 = vsub.f32 %v248, %v254
        %v259 = vsub.f32 %v249, %v255
        %v260 = vmul.f32 %v258, 1.442695
        %v261 = vpow.pop %v260
        %v262 = vmul.f32 %v259, 1.442695
        %v263 = vpow.pop %v262
        %v264 = vmul.f32 %v256, %v261
        %v265 = vmul.f32 %v257, %v263
        %267 = vset.pattern.permute.xlu0 0
        %268 = vperm.xlu0 %267, %v254
        %v269 = vpop.permute.xlu0 %268
        %272 = vset.pattern.permute.xlu0 0
        %273 = vperm.xlu0 %272, %v255
        %v274 = vpop.permute.xlu0 %273
        %v276 = vsub.f32 %v246, %v269
        %v277 = vsub.f32 %v247, %v274
        %v278 = vmul.f32 %v276, 1.442695
        %v279 = vpow.pop %v278
        %v280 = vmul.f32 %v277, 1.442695
        %v281 = vpow.pop %v280
        %282 = vadd.xlane.f32.xlu0 %v279
        %v283 = vpop.xlane.xlu0 %282
        %284 = vadd.xlane.f32.xlu0 %v281
        %v285 = vpop.xlane.xlu0 %284
        %v286 = vadd.f32 %v264, %v283
        %v287 = vadd.f32 %v265, %v285
        %vm288 = vcmask 7168
        %289 = vst.msk [vmem:[#allocation3] sm:$0xff] %vm288, %v286
        %290 = vst.msk [vmem:[#allocation3 + $0x8] sm:$0xff] %vm288, %v287
        %291 = vst.msk [vmem:[#allocation2] sm:$0xff] %vm288, %v254
        %292 = vst.msk [vmem:[#allocation2 + $0x8] sm:$0xff] %vm288, %v255
        %293 = vset.pattern.permute.xlu0 0
        %294 = vperm.xlu0 %293, %v227
        %v295 = vpop.permute.xlu0 %294
        %296 = vset.pattern.permute.xlu0 0
        %297 = vperm.xlu0 %296, %v228
        %v298 = vpop.permute.xlu0 %297
        %vm299 = vcmp.eq.s32.totalorder %v240, %v295
        %vm300 = vcmp.eq.s32.totalorder %v240, %v298
        %v301 = vsel %vm299, 0.90034723, 0.00034722223
        %v302 = vsel %vm300, 0.90034723, 0.00034722223
        %v303 = vsel %vm244, %v301, 0.0
        %v304 = vsel %vm245, %v302, 0.0
        %v305 = vsel %vm244, %v225, 0.0
        %v306 = vsel %vm245, %v226, 0.0
        %v307 = vld [vmem:[#allocation4] sm:$0xff]
        %v308 = vld [vmem:[#allocation4 + $0x8] sm:$0xff]
        %v309 = vmul.f32 %v303, %v305
        %v310 = vmul.f32 %v304, %v306
        %311 = vadd.xlane.f32.xlu0 %v309
        %v312 = vpop.xlane.xlu0 %311
        %313 = vadd.xlane.f32.xlu0 %v310
        %v314 = vpop.xlane.xlu0 %313
        %v315 = vadd.f32 %v307, %v312
        %v316 = vadd.f32 %v308, %v314
        %317 = vst.msk [vmem:[#allocation4] sm:$0xff] %vm288, %v315
        %318 = vst.msk [vmem:[#allocation4 + $0x8] sm:$0xff] %vm288, %v316
        %p319 = scmp.eq.s32.totalorder %s21, 2
        // Predicated region
        $region37: #{tpu_custom_call.1} parent=27 // pred_check
          %p320 = pneg %p319
        $region38: #{tpu_custom_call.1} parent=27 // pred_check_branch
          %322 = sbr.rel (%p320) target = $region40
        $region39: #{tpu_custom_call.1} parent=27 // pred_region
          %v323 = vld [vmem:[#allocation2] sm:$0xff]
          %v324 = vld [vmem:[#allocation2 + $0x8] sm:$0xff]
          %v325 = vld [vmem:[#allocation3] sm:$0xff]
          %v326 = vld [vmem:[#allocation3 + $0x8] sm:$0xff]
          %v327 = vlog2.pop %v325
          %v328 = vmul.f32 %v327, 0.6931472
          %v329 = vlog2.pop %v326
          %v330 = vmul.f32 %v329, 0.6931472
          %v331 = vadd.f32 %v323, %v328
          %v332 = vadd.f32 %v324, %v330
          %v333 = vld [vmem:[#allocation4] sm:$0xff]
          %v334 = vld [vmem:[#allocation4 + $0x8] sm:$0xff]
          %v335 = vsub.f32 %v331, %v333
          %v336 = vsub.f32 %v332, %v334
          %v337 = vsel %vm241, %v335, 0.0
          %v338 = vsel %vm242, %v336, 0.0
          %339 = vst.msk [vmem:[%s212] sm:$0xff] %vm288, %v337
          %340 = vst.msk [vmem:[%s212 + $0x8] sm:$0xff] %vm288, %v338
        $region40: #{tpu_custom_call.1} parent=27 // pred_fallthru
          _
        %s341 = smul.u32 2, %s20
        %p342 = scmp.lt.s32.totalorder %s341, 5
        %s343 = scalar_select %p342, %s341, 5
        %s344 = smul.addr %s343, 8
        %s345 = scalar_lea.vmem %s2, %s344
        // Predicated region
        $region41: #{tpu_custom_call.1} parent=27 // pred_check
          %p346 = pneg %p100
        $region42: #{tpu_custom_call.1} parent=27 // pred_check_branch
          %348 = sbr.rel (%p346) target = $region44
        $region43: #{tpu_custom_call.1} parent=27 // pred_region
          %s349 = smul.u32 2, %s20
        $region44: #{tpu_custom_call.1} parent=27 // pred_fallthru
          _
      $region28: #{tpu_custom_call.1} parent=5 // pred_fallthru
        _
      %p350 = scmp.le.s32.totalorder 2, %s11
      // Predicated region
      $region45: #{tpu_custom_call.1} parent=5 // pred_check
        %p351 = pneg %p350
      $region46: #{tpu_custom_call.1} parent=5 // pred_check_branch
        %353 = sbr.rel (%p351) target = $region48
      $region47: #{tpu_custom_call.1} parent=5 // pred_region
        %s354 = ssub.s32 %s11, 2
        // Predicated region
        $region49: #{tpu_custom_call.1} parent=47 // pred_check
          %p355 = pneg %p106
        $region50: #{tpu_custom_call.1} parent=47 // pred_check_branch
          %357 = sbr.rel (%p355) target = $region52
        $region51: #{tpu_custom_call.1} parent=47 // pred_region
          %s358 = smul.u32 2, %s22
          %p359 = scmp.lt.s32.totalorder %s358, 5
          %s360 = scalar_select %p359, %s358, 5
          %s361 = smul.addr %s360, 8
          %s362 = scalar_lea.vmem %s2, %s361
        $region52: #{tpu_custom_call.1} parent=47 // pred_fallthru
          _
      $region48: #{tpu_custom_call.1} parent=5 // pred_fallthru
        _
    $region6: #{tpu_custom_call.1} parent=1 // loop_footer
      %s15 = sadd.s32 1, %s11
    $region7: #{tpu_custom_call.1} parent=1 // loop_footer_branch
      %10 = sbr.rel target = $region3
    $region8: #{tpu_custom_call.1} parent=1 // loop_exit
      _
    %363 = vsyncpa [#allocation6], 1
    %s364 = scalar_lea.sflag [#allocation6], 1
    %365 = vsyncpa %s364, 1

</llo_original>
